<compile_context>
chip_gen: v6e
topology: v6e:2x2x1
jax: 0.10.0
libtpu: 0.0.40
codegen_flags: <defaults>
</compile_context>

<pallas_src>
import functools

import jax
import jax.numpy as jnp
import numpy as np
from jax.experimental import pallas as pl
from jax.experimental.pallas import tpu as pltpu

OBS_DIM = 8        # LunarLander-v2 observation space
HIDDEN = 128
N_ACTIONS = 4      # LunarLander-v2 discrete action space
HEAD_PAD = 128     # actor(+critic) head padded to a full lane group
TILE_B = 512       # batch rows per grid step


def _round_up(n, m):
    return ((n + m - 1) // m) * m


def _orthogonal(key, shape, gain):
    """Deterministic orthogonal init (matches torch.nn.init.orthogonal_ semantics)."""
    rows, cols = shape
    n = max(rows, cols)
    a = jax.random.normal(key, (n, n), dtype=jnp.float32)
    q, r = jnp.linalg.qr(a)
    q = q * jnp.sign(jnp.diag(r))  # sign fix, as torch does
    return gain * q[:rows, :cols]


def _agent_fwd_kernel(x_ref, w1_ref, b1_ref, w2_ref, b2_ref, out_ref):
    # Fused MLP on one batch tile:
    #   hidden = relu(x @ W1 + b1)        (TILE_B, 128)
    #   head   = hidden @ W2pad + b2pad   (TILE_B, 128)  lane-dense store
    x = x_ref[...]
    h = jnp.dot(x, w1_ref[...], preferred_element_type=jnp.float32) + b1_ref[...]
    h = jnp.maximum(h, 0.0)
    out_ref[...] = (
        jnp.dot(h, w2_ref[...], preferred_element_type=jnp.float32) + b2_ref[...]
    )


def _agent_head_call(x, w1, b1, w2p, b2p):
    """Runs the fused kernel; returns the padded (B, HEAD_PAD) head slab."""
    B = x.shape[0]
    tile_b = min(TILE_B, _round_up(B, 8))
    Bp = _round_up(B, tile_b)
    if Bp != B:
        x = jnp.pad(x, ((0, Bp - B), (0, 0)))
    grid = (Bp // tile_b,)

    out = pl.pallas_call(
        _agent_fwd_kernel,
        out_shape=jax.ShapeDtypeStruct((Bp, HEAD_PAD), jnp.float32),
        grid=grid,
        in_specs=[
            # batch-tiled activations
            pl.BlockSpec((tile_b, OBS_DIM), lambda i: (i, 0)),
            # weights / biases: constant index_map -> stay resident in VMEM
            pl.BlockSpec((OBS_DIM, HIDDEN), lambda i: (0, 0)),
            pl.BlockSpec((1, HIDDEN), lambda i: (0, 0)),
            pl.BlockSpec((HIDDEN, HEAD_PAD), lambda i: (0, 0)),
            pl.BlockSpec((1, HEAD_PAD), lambda i: (0, 0)),
        ],
        out_specs=pl.BlockSpec((tile_b, HEAD_PAD), lambda i: (i, 0)),
        compiler_params=pltpu.CompilerParams(
            dimension_semantics=("parallel",),  # megacore sharding on v7x
        ),
    )(x, w1, b1, w2p, b2p)
    return out[:B]


@jax.jit
def agent_forward(x, w1, b1, w2p, b2p):
    """Agent.forward: x (B, OBS_DIM) f32 -> logits (B, N_ACTIONS) f32."""
    head = _agent_head_call(x, w1, b1, w2p, b2p)
    return head[:, :N_ACTIONS]


@jax.jit
def agent_forward_and_value(x, w1, b1, w2p, b2p):
    """Fused actor+critic read of the same kernel output (critic is column
    N_ACTIONS of the padded head)."""
    head = _agent_head_call(x, w1, b1, w2p, b2p)
    return head[:, :N_ACTIONS], head[:, N_ACTIONS:N_ACTIONS + 1]


# TODO(synk): categorical sampling / log_prob / entropy (get_action) are left to
# plain JAX on the returned logits; not fused into the kernel.


def make_params(key):
    k1, k2, k3 = jax.random.split(key, 3)
    # network: Linear(OBS_DIM, 128), orthogonal(std=sqrt(2)), bias=0
    # stored as (in, out) = transpose of PyTorch's (out, in) weight
    w1 = _orthogonal(k1, (HIDDEN, OBS_DIM), gain=float(np.sqrt(2))).T  # (OBS_DIM, HIDDEN)
    b1 = jnp.zeros((1, HIDDEN), jnp.float32)

    # actor: Linear(128, N_ACTIONS), orthogonal(std=0.01), bias=0
    w_actor = _orthogonal(k2, (N_ACTIONS, HIDDEN), gain=0.01).T        # (HIDDEN, N_ACTIONS)
    # critic: Linear(128, 1), orthogonal(std=1), bias=0  (fused into padded head)
    w_critic = _orthogonal(k3, (1, HIDDEN), gain=1.0).T                # (HIDDEN, 1)

    # Padded, lane-dense head: columns [0, N_ACTIONS) = actor, col N_ACTIONS = critic,
    # remaining columns zero.
    w2p = jnp.zeros((HIDDEN, HEAD_PAD), jnp.float32)
    w2p = w2p.at[:, :N_ACTIONS].set(w_actor)
    w2p = w2p.at[:, N_ACTIONS:N_ACTIONS + 1].set(w_critic)
    b2p = jnp.zeros((1, HEAD_PAD), jnp.float32)
    return w1, b1, w2p, b2p, w_actor, w_critic


if __name__ == "__main__":
    key = jax.random.PRNGKey(0)
    kx, kp, kx2 = jax.random.split(key, 3)

    w1, b1, w2p, b2p, w_actor, w_critic = make_params(kp)

    def ref_logits(x):
        h = jnp.maximum(x @ w1 + b1, 0.0)
        return h @ w_actor

    def ref_value(x):
        h = jnp.maximum(x @ w1 + b1, 0.0)
        return h @ w_critic

    # Small demo batch (matches a per-step rollout).
    B = 8
    x = jax.random.normal(kx, (B, OBS_DIM), dtype=jnp.float32)
    logits = agent_forward(x, w1, b1, w2p, b2p)
    jax.block_until_ready(logits)
    assert logits.shape == (B, N_ACTIONS)
    assert jnp.allclose(logits, ref_logits(x), atol=1e-5, rtol=1e-5)

    # Larger, non-multiple batch exercises the batch grid + padding path.
    B2 = 1000
    x2 = jax.random.normal(kx2, (B2, OBS_DIM), dtype=jnp.float32)
    logits2, value2 = agent_forward_and_value(x2, w1, b1, w2p, b2p)
    jax.block_until_ready((logits2, value2))
    assert logits2.shape == (B2, N_ACTIONS) and value2.shape == (B2, 1)
    assert jnp.allclose(logits2, ref_logits(x2), atol=1e-4, rtol=1e-4)
    assert jnp.allclose(value2, ref_value(x2), atol=1e-4, rtol=1e-4)

    print("KERNEL_OK")
</pallas_src>

<mosaic_0001>
module attributes {stable_mosaic.version = 11 : i64} {
  func.func @_agent_fwd_kernel(%arg0: i32, %arg1: memref<8x8xf32, #tpu.memory_space<vmem>>, %arg2: memref<8x128xf32, #tpu.memory_space<vmem>>, %arg3: memref<1x128xf32, #tpu.memory_space<vmem>>, %arg4: memref<128x128xf32, #tpu.memory_space<vmem>>, %arg5: memref<1x128xf32, #tpu.memory_space<vmem>>, %arg6: memref<8x128xf32, #tpu.memory_space<vmem>>) attributes {dimension_semantics = [#tpu.dimension_semantics<parallel>], iteration_bounds = array<i64: 1>, scalar_prefetch = 0 : i64, scratch_operands = 0 : i64, tpu.core_type = #tpu.core_type<tc>, window_params = [{transform_indices = @transform_0, window_bounds = array<i64: 8, 8>}, {pipeline_mode = #tpu.pipeline_mode<synchronous>, transform_indices = @transform_1, window_bounds = array<i64: 8, 128>}, {pipeline_mode = #tpu.pipeline_mode<synchronous>, transform_indices = @transform_2, window_bounds = array<i64: 1, 128>}, {pipeline_mode = #tpu.pipeline_mode<synchronous>, transform_indices = @transform_3, window_bounds = array<i64: 128, 128>}, {pipeline_mode = #tpu.pipeline_mode<synchronous>, transform_indices = @transform_4, window_bounds = array<i64: 1, 128>}, {transform_indices = @transform_5, window_bounds = array<i64: 8, 128>}]} {
    %c0 = arith.constant 0 : index
    %c0_0 = arith.constant 0 : index
    %0 = vector.load %arg1[%c0, %c0_0] : memref<8x8xf32, #tpu.memory_space<vmem>>, vector<8x8xf32>
    %c0_1 = arith.constant 0 : index
    %c0_2 = arith.constant 0 : index
    %1 = vector.load %arg2[%c0_1, %c0_2] : memref<8x128xf32, #tpu.memory_space<vmem>>, vector<8x128xf32>
    %cst = arith.constant dense<0.000000e+00> : vector<8x128xf32>
    %2 = tpu.matmul %0, %1, %cst {dimension_numbers = #tpu.dot_dimension_numbers<[1], [0], [0], [1], [0, 0, 1, 1], [], []>} : vector<8x8xf32>, vector<8x128xf32>, vector<8x128xf32> -> vector<8x128xf32>
    %c0_3 = arith.constant 0 : index
    %c0_4 = arith.constant 0 : index
    %3 = vector.load %arg3[%c0_3, %c0_4] : memref<1x128xf32, #tpu.memory_space<vmem>>, vector<1x128xf32>
    %4 = vector.broadcast %3 : vector<1x128xf32> to vector<8x128xf32>
    %5 = arith.addf %2, %4 : vector<8x128xf32>
    %cst_5 = arith.constant 0.000000e+00 : f32
    %6 = vector.broadcast %cst_5 : f32 to vector<8x128xf32>
    %7 = arith.maximumf %5, %6 : vector<8x128xf32>
    %c0_6 = arith.constant 0 : index
    %c0_7 = arith.constant 0 : index
    %8 = vector.load %arg4[%c0_6, %c0_7] : memref<128x128xf32, #tpu.memory_space<vmem>>, vector<128x128xf32>
    %cst_8 = arith.constant dense<0.000000e+00> : vector<8x128xf32>
    %9 = tpu.matmul %7, %8, %cst_8 {dimension_numbers = #tpu.dot_dimension_numbers<[1], [0], [0], [1], [0, 0, 1, 1], [], []>} : vector<8x128xf32>, vector<128x128xf32>, vector<8x128xf32> -> vector<8x128xf32>
    %c0_9 = arith.constant 0 : index
    %c0_10 = arith.constant 0 : index
    %10 = vector.load %arg5[%c0_9, %c0_10] : memref<1x128xf32, #tpu.memory_space<vmem>>, vector<1x128xf32>
    %11 = vector.broadcast %10 : vector<1x128xf32> to vector<8x128xf32>
    %12 = arith.addf %9, %11 : vector<8x128xf32>
    %c0_11 = arith.constant 0 : index
    %c0_12 = arith.constant 0 : index
    %13 = vector.load %arg6[%c0_11, %c0_12] : memref<8x128xf32, #tpu.memory_space<vmem>>, vector<8x128xf32>
    tpu.vector_store %arg6[%c0_11, %c0_12], %12 {strides = array<i32>} : memref<8x128xf32, #tpu.memory_space<vmem>>, vector<8x128xf32>,
    return
  }
  func.func @transform_0(%arg0: i32) -> (i32, i32) {
    %c0_i32 = arith.constant 0 : i32
    %c0_i32_0 = arith.constant 0 : i32
    return %arg0, %c0_i32 : i32, i32
  }
  func.func @transform_1(%arg0: i32) -> (i32, i32) {
    %c0_i32 = arith.constant 0 : i32
    %c0_i32_0 = arith.constant 0 : i32
    %c0_i32_1 = arith.constant 0 : i32
    return %c0_i32, %c0_i32_0 : i32, i32
  }
  func.func @transform_2(%arg0: i32) -> (i32, i32) {
    %c0_i32 = arith.constant 0 : i32
    %c0_i32_0 = arith.constant 0 : i32
    %c0_i32_1 = arith.constant 0 : i32
    return %c0_i32, %c0_i32_0 : i32, i32
  }
  func.func @transform_3(%arg0: i32) -> (i32, i32) {
    %c0_i32 = arith.constant 0 : i32
    %c0_i32_0 = arith.constant 0 : i32
    %c0_i32_1 = arith.constant 0 : i32
    return %c0_i32, %c0_i32_0 : i32, i32
  }
  func.func @transform_4(%arg0: i32) -> (i32, i32) {
    %c0_i32 = arith.constant 0 : i32
    %c0_i32_0 = arith.constant 0 : i32
    %c0_i32_1 = arith.constant 0 : i32
    return %c0_i32, %c0_i32_0 : i32, i32
  }
  func.func @transform_5(%arg0: i32) -> (i32, i32) {
    %c0_i32 = arith.constant 0 : i32
    %c0_i32_0 = arith.constant 0 : i32
    return %arg0, %c0_i32 : i32, i32
  }
}

</mosaic_0001>

<llo_original>
// kernel: agent_forward.1
$region0: #{agent_forward.1}
  #allocation0 [shape = 'u32[]', space=smem, size = 0x4, offset = 0x4, fixed_abs, tag = 'smem constant byte address 0x4 - core index']
  #allocation1 [shape = 'u32[144,128]{1,0:T(1,128)}', space=vmem, size = 0x12000, scoped, tag = 'internal scratch']
  %s0 = inlined_call_operand.hbm [shape: f32[8,8], index: 0, kind: input, shape index: {}]
  %s1 = inlined_call_operand.hbm [shape: f32[8,128], index: 1, kind: input, shape index: {}]
  %s2 = inlined_call_operand.vmem [shape: f32[1,128], index: 2, kind: input, shape index: {}]
  %s3 = inlined_call_operand.hbm [shape: f32[128,128], index: 3, kind: input, shape index: {}]
  %s4 = inlined_call_operand.vmem [shape: f32[1,128], index: 4, kind: input, shape index: {}]
  %s5 = inlined_call_operand.vmem [shape: f32[8,128], index: 5, kind: output, shape index: {}]
  %s6 = sld [smem:[#allocation0]]
  $region42: #{agent_forward.1} parent=0
    _
  %s8 = ssub.s32 1, %s6
  %s9 = scalar_select 0, %s8, %s6
  $region1: #{agent_forward.1} parent=0
    #allocation2 [shape = 'u8[4096]{0}', space=vmem, size = 0x1000, scoped, tag = 'input window, operand 0, single buffered']
    #allocation3 [shape = 's32[1]{0}', space=sflag, size = 0x4, scoped, tag = 'scoped memory for agent_forward.1']
    #allocation4 [shape = 'u8[4096]{0}', space=vmem, size = 0x1000, scoped, tag = 'input window, operand 1, single buffered']
    #allocation5 [shape = 's32[1]{0}', space=sflag, size = 0x4, scoped, tag = 'scoped memory for agent_forward.1']
    #allocation6 [shape = 'u8[65536]{0}', space=vmem, size = 0x10000, scoped, tag = 'input window, operand 3, single buffered']
    %10 = vsyncpa [#allocation3], 0
    %11 = vsyncpa [#allocation5], 0
    // Predicated region
    $region2: #{agent_forward.1} parent=1 // pred_check
      _
    $region3: #{agent_forward.1} parent=1 // pred_check_branch
      %13 = sbr.rel (0) target = $region5
    $region4: #{agent_forward.1} parent=1 // pred_region
      %s15 = ssub.s32 128, 128
      %16 = vsyncadd [#allocation3], %s15
      %s18 = sshll.u32 [#allocation2], 4
      %s19 = int_to_ptr.vmem [resolvable:$true] %s18
      %21 = dma.hbm_to_vmem [thread:$0]  %s0, 128, %s19, [#allocation3]
    $region5: #{agent_forward.1} parent=1 // pred_fallthru
      _
    // Predicated region
    $region6: #{agent_forward.1} parent=1 // pred_check
      _
    $region7: #{agent_forward.1} parent=1 // pred_check_branch
      %23 = sbr.rel (0) target = $region9
    $region8: #{agent_forward.1} parent=1 // pred_region
      %s25 = ssub.s32 128, 128
      %26 = vsyncadd [#allocation5], %s25
      %s28 = sshll.u32 [#allocation4], 4
      %s29 = int_to_ptr.vmem [resolvable:$true] %s28
      %31 = dma.hbm_to_vmem [thread:$0]  %s1, 128, %s29, [#allocation5]
    $region9: #{agent_forward.1} parent=1 // pred_fallthru
      _
    // Predicated region
    $region10: #{agent_forward.1} parent=1 // pred_check
      _
    $region11: #{agent_forward.1} parent=1 // pred_check_branch
      %33 = sbr.rel (0) target = $region13
    $region12: #{agent_forward.1} parent=1 // pred_region
      _
    $region13: #{agent_forward.1} parent=1 // pred_fallthru
      _
    // Predicated region
    $region14: #{agent_forward.1} parent=1 // pred_check
      _
    $region15: #{agent_forward.1} parent=1 // pred_check_branch
      %35 = sbr.rel (0) target = $region17
    $region16: #{agent_forward.1} parent=1 // pred_region
      %s37 = ssub.s32 2048, 2048
      %38 = vsyncadd [#allocation5], %s37
      %s39 = sshll.u32 [#allocation6], 4
      %s40 = int_to_ptr.vmem [resolvable:$true] %s39
      %45 = dma.hbm_to_vmem [thread:$0]  %s3, 2048, %s40, [#allocation5], 128, 128, 8
    $region17: #{agent_forward.1} parent=1 // pred_fallthru
      _
    // Predicated region
    $region18: #{agent_forward.1} parent=1 // pred_check
      _
    $region19: #{agent_forward.1} parent=1 // pred_check_branch
      %47 = sbr.rel (0) target = $region21
    $region20: #{agent_forward.1} parent=1 // pred_region
      _
    $region21: #{agent_forward.1} parent=1 // pred_fallthru
      _
    // Predicated region
    $region22: #{agent_forward.1} parent=1 // pred_check
      _
    $region23: #{agent_forward.1} parent=1 // pred_check_branch
      %49 = sbr.rel (0) target = $region25
    $region24: #{agent_forward.1} parent=1 // pred_region
      %50 = dma.done [#allocation3], 128
    $region25: #{agent_forward.1} parent=1 // pred_fallthru
      _
    // Predicated region
    $region26: #{agent_forward.1} parent=1 // pred_check
      _
    $region27: #{agent_forward.1} parent=1 // pred_check_branch
      %52 = sbr.rel (0) target = $region29
    $region28: #{agent_forward.1} parent=1 // pred_region
      %53 = dma.done [#allocation5], 128
    $region29: #{agent_forward.1} parent=1 // pred_fallthru
      _
    // Predicated region
    $region30: #{agent_forward.1} parent=1 // pred_check
      _
    $region31: #{agent_forward.1} parent=1 // pred_check_branch
      %55 = sbr.rel (0) target = $region33
    $region32: #{agent_forward.1} parent=1 // pred_region
      %56 = dma.done [#allocation5], 2048
    $region33: #{agent_forward.1} parent=1 // pred_fallthru
      _
    %v57 = vld [vmem:[#allocation2] sm:$0xff]
    %v58 = vld [vmem:[#allocation4] sm:$0xff]
    %v59 = vld [vmem:[%s2] sm:$0x1]
    %v61 = vlaneseq
    %v62 = vshrl.u32 %v61, 7
    %v63 = vsub.s32 0, %v62
    %v64 = vrot.slane %v59, %v63
    %vm66 = vcmask 64512
    %v68 = vsel %vm66, %v57, 0
    %70 = vmatprep.subr.mxu0 0.0
    %71 = vmatpush1.msra.mxu0 0.0
    %72 = vmatprep.subr.mxu0 0.0
    %73 = vmatpush1.msra.mxu0 0.0
    %74 = vmatprep.subr.mxu0 0.0
    %75 = vmatpush1.msra.mxu0 0.0
    %76 = vmatprep.subr.mxu0 0.0
    %77 = vmatpush1.msra.mxu0 0.0
    %78 = vmatprep.subr.mxu0 0.0
    %79 = vmatpush1.msra.mxu0 0.0
    %80 = vmatprep.subr.mxu0 0.0
    %81 = vmatpush1.msra.mxu0 0.0
    %82 = vmatprep.subr.mxu0 0.0
    %83 = vmatpush1.msra.mxu0 0.0
    %84 = vmatprep.subr.mxu0 0.0
    %85 = vmatpush1.msra.mxu0 0.0
    %86 = vmatprep.subr.mxu0 0.0
    %87 = vmatpush1.msra.mxu0 0.0
    %88 = vmatprep.subr.mxu0 0.0
    %89 = vmatpush1.msra.mxu0 0.0
    %90 = vmatprep.subr.mxu0 0.0
    %91 = vmatpush1.msra.mxu0 0.0
    %92 = vmatprep.subr.mxu0 0.0
    %93 = vmatpush1.msra.mxu0 0.0
    %94 = vmatprep.subr.mxu0 0.0
    %95 = vmatpush1.msra.mxu0 0.0
    %96 = vmatprep.subr.mxu0 0.0
    %97 = vmatpush1.msra.mxu0 0.0
    %98 = vmatprep.subr.mxu0 0.0
    %99 = vmatpush1.msra.mxu0 0.0
    %100 = vmatprep.subr.mxu0 0.0
    %101 = vmatpush1.msra.mxu0 %v58
    %102 = vmatprep.subr.mxu0 0.0
    %103 = vmatpush2.msra.mxu0 0.0
    %104 = vmatprep.subr.mxu0 0.0
    %105 = vmatpush2.msra.mxu0 0.0
    %106 = vmatprep.subr.mxu0 0.0
    %107 = vmatpush2.msra.mxu0 0.0
    %108 = vmatprep.subr.mxu0 0.0
    %109 = vmatpush2.msra.mxu0 0.0
    %110 = vmatprep.subr.mxu0 0.0
    %111 = vmatpush2.msra.mxu0 0.0
    %112 = vmatprep.subr.mxu0 0.0
    %113 = vmatpush2.msra.mxu0 0.0
    %114 = vmatprep.subr.mxu0 0.0
    %115 = vmatpush2.msra.mxu0 0.0
    %116 = vmatprep.subr.mxu0 0.0
    %117 = vmatpush2.msra.mxu0 0.0
    %118 = vmatprep.subr.mxu0 0.0
    %119 = vmatpush2.msra.mxu0 0.0
    %120 = vmatprep.subr.mxu0 0.0
    %121 = vmatpush2.msra.mxu0 0.0
    %122 = vmatprep.subr.mxu0 0.0
    %123 = vmatpush2.msra.mxu0 0.0
    %124 = vmatprep.subr.mxu0 0.0
    %125 = vmatpush2.msra.mxu0 0.0
    %126 = vmatprep.subr.mxu0 0.0
    %127 = vmatpush2.msra.mxu0 0.0
    %128 = vmatprep.subr.mxu0 0.0
    %129 = vmatpush2.msra.mxu0 0.0
    %130 = vmatprep.subr.mxu0 0.0
    %131 = vmatpush2.msra.mxu0 0.0
    %132 = vmatprep.subr.mxu0 0.0
    %133 = vmatpush2.msra.mxu0 0.0
    %134 = vmatprep.mubr.f32.mxu0 0.0
    %135 = vmatmul.mubr.f32.gmra.mxu0 %v68
    %v136 = vpop.f32.mrf.mxu0
    %v137 = vadd.f32 %v64, %v136
    %v138 = vpop.f32.mrf.mxu0
    %139 = vdwg.mxu0
    %v140 = vmax.f32 %v137, 0.0
    %v141 = vld [vmem:[#allocation6] sm:$0xff]
    %v142 = vld [vmem:[#allocation6 + $0x8] sm:$0xff]
    %v143 = vld [vmem:[#allocation6 + $0x10] sm:$0xff]
    %v144 = vld [vmem:[#allocation6 + $0x18] sm:$0xff]
    %v145 = vld [vmem:[#allocation6 + $0x20] sm:$0xff]
    %v146 = vld [vmem:[#allocation6 + $0x28] sm:$0xff]
    %v147 = vld [vmem:[#allocation6 + $0x30] sm:$0xff]
    %v148 = vld [vmem:[#allocation6 + $0x38] sm:$0xff]
    %v149 = vld [vmem:[#allocation6 + $0x40] sm:$0xff]
    %v150 = vld [vmem:[#allocation6 + $0x48] sm:$0xff]
    %v151 = vld [vmem:[#allocation6 + $0x50] sm:$0xff]
    %v152 = vld [vmem:[#allocation6 + $0x58] sm:$0xff]
    %v153 = vld [vmem:[#allocation6 + $0x60] sm:$0xff]
    %v154 = vld [vmem:[#allocation6 + $0x68] sm:$0xff]
    %v155 = vld [vmem:[#allocation6 + $0x70] sm:$0xff]
    %v156 = vld [vmem:[#allocation6 + $0x78] sm:$0xff]
    %v157 = vld [vmem:[%s4] sm:$0x1]
    %v159 = vlaneseq
    %v160 = vshrl.u32 %v159, 7
    %v161 = vsub.s32 0, %v160
    %v162 = vrot.slane %v157, %v161
    %164 = vmatprep.subr.mxu0 0.0
    %165 = vmatpush1.msra.mxu0 %v156
    %166 = vmatprep.subr.mxu0 0.0
    %167 = vmatpush1.msra.mxu0 %v155
    %168 = vmatprep.subr.mxu0 0.0
    %169 = vmatpush1.msra.mxu0 %v154
    %170 = vmatprep.subr.mxu0 0.0
    %171 = vmatpush1.msra.mxu0 %v153
    %172 = vmatprep.subr.mxu0 0.0
    %173 = vmatpush1.msra.mxu0 %v152
    %174 = vmatprep.subr.mxu0 0.0
    %175 = vmatpush1.msra.mxu0 %v151
    %176 = vmatprep.subr.mxu0 0.0
    %177 = vmatpush1.msra.mxu0 %v150
    %178 = vmatprep.subr.mxu0 0.0
    %179 = vmatpush1.msra.mxu0 %v149
    %180 = vmatprep.subr.mxu0 0.0
    %181 = vmatpush1.msra.mxu0 %v148
    %182 = vmatprep.subr.mxu0 0.0
    %183 = vmatpush1.msra.mxu0 %v147
    %184 = vmatprep.subr.mxu0 0.0
    %185 = vmatpush1.msra.mxu0 %v146
    %186 = vmatprep.subr.mxu0 0.0
    %187 = vmatpush1.msra.mxu0 %v145
    %188 = vmatprep.subr.mxu0 0.0
    %189 = vmatpush1.msra.mxu0 %v144
    %190 = vmatprep.subr.mxu0 0.0
    %191 = vmatpush1.msra.mxu0 %v143
    %192 = vmatprep.subr.mxu0 0.0
    %193 = vmatpush1.msra.mxu0 %v142
    %194 = vmatprep.subr.mxu0 0.0
    %195 = vmatpush1.msra.mxu0 %v141
    %196 = vmatprep.subr.mxu0 0.0
    %197 = vmatpush2.msra.mxu0 0.0
    %198 = vmatprep.subr.mxu0 0.0
    %199 = vmatpush2.msra.mxu0 0.0
    %200 = vmatprep.subr.mxu0 0.0
    %201 = vmatpush2.msra.mxu0 0.0
    %202 = vmatprep.subr.mxu0 0.0
    %203 = vmatpush2.msra.mxu0 0.0
    %204 = vmatprep.subr.mxu0 0.0
    %205 = vmatpush2.msra.mxu0 0.0
    %206 = vmatprep.subr.mxu0 0.0
    %207 = vmatpush2.msra.mxu0 0.0
    %208 = vmatprep.subr.mxu0 0.0
    %209 = vmatpush2.msra.mxu0 0.0
    %210 = vmatprep.subr.mxu0 0.0
    %211 = vmatpush2.msra.mxu0 0.0
    %212 = vmatprep.subr.mxu0 0.0
    %213 = vmatpush2.msra.mxu0 0.0
    %214 = vmatprep.subr.mxu0 0.0
    %215 = vmatpush2.msra.mxu0 0.0
    %216 = vmatprep.subr.mxu0 0.0
    %217 = vmatpush2.msra.mxu0 0.0
    %218 = vmatprep.subr.mxu0 0.0
    %219 = vmatpush2.msra.mxu0 0.0
    %220 = vmatprep.subr.mxu0 0.0
    %221 = vmatpush2.msra.mxu0 0.0
    %222 = vmatprep.subr.mxu0 0.0
    %223 = vmatpush2.msra.mxu0 0.0
    %224 = vmatprep.subr.mxu0 0.0
    %225 = vmatpush2.msra.mxu0 0.0
    %226 = vmatprep.subr.mxu0 0.0
    %227 = vmatpush2.msra.mxu0 0.0
    %228 = vmatprep.mubr.f32.mxu0 0.0
    %229 = vmatmul.mubr.f32.gmra.mxu0 %v140
    %v230 = vpop.f32.mrf.mxu0
    %v231 = vadd.f32 %v162, %v230
    %v232 = vpop.f32.mrf.mxu0
    %233 = vdwg.mxu0
    %234 = vst [vmem:[%s5] sm:$0xff] %v231
    // Predicated region
    $region34: #{agent_forward.1} parent=1 // pred_check
      _
    $region35: #{agent_forward.1} parent=1 // pred_check_branch
      %236 = sbr.rel (0) target = $region37
    $region36: #{agent_forward.1} parent=1 // pred_region
      _
    $region37: #{agent_forward.1} parent=1 // pred_fallthru
      _
    // Predicated region
    $region38: #{agent_forward.1} parent=1 // pred_check
      _
    $region39: #{agent_forward.1} parent=1 // pred_check_branch
      %238 = sbr.rel (0) target = $region41
    $region40: #{agent_forward.1} parent=1 // pred_region
      _
    $region41: #{agent_forward.1} parent=1 // pred_fallthru
      _
    %239 = vsyncpa [#allocation3], 1
    %240 = vsyncpa [#allocation5], 1

</llo_original>
